<compile_context>
chip_gen: v7x
topology: tpu7x:2x2x1
jax: 0.10.0
libtpu: 0.0.40
codegen_flags: <defaults>
</compile_context>

<pallas_src>
import functools

import numpy as np
import jax
import jax.numpy as jnp
from jax import lax
from jax.experimental import pallas as pl
from jax.experimental.pallas import tpu as pltpu

_LANE = 128            # samples map to the lane axis
_ROW_CHUNK = 32        # rows per vreg-resident inner chunk (4 vregs/array, f32)
_MAX_ROW_TILE = 2048   # 2048 x 128 f32 = 1 MiB per array per grid step


@functools.lru_cache(maxsize=None)
def _build_rbf_fn(rows, row_tile, num_c):
    """Build + jit the padded RBF evaluator for a fixed (rows, tile, C)."""
    grid = (rows // row_tile,)
    n_chunks = row_tile // _ROW_CHUNK
    unroll = int(min(num_c, 8))   # full unroll for small C, capped for large C

    def kernel(scal_ref, c_ref, sw_ref, csw_ref, x_ref, g_ref, gp_ref, gp2_ref):
        # scal_ref : SMEM (2,)   [-1/(2 s^2), -1/s^2]
        # c_ref    : SMEM (C,)   active centers
        # sw_ref   : SMEM (C,)   signs * weights (nonzero only)
        # csw_ref  : SMEM (C,)   centers * signs * weights
        # x_ref    : VMEM (row_tile, 128)
        # outputs  : g, gp, gp**2   (row_tile, 128) each
        neg_inv_2s2 = scal_ref[0]
        neg_inv_s2 = scal_ref[1]

        @pl.loop(0, n_chunks)
        def _(r):
            r0 = pl.multiple_of(r * _ROW_CHUNK, _ROW_CHUNK)
            x = x_ref[pl.ds(r0, _ROW_CHUNK), :]          # (32, 128) -> 4 vregs

            def center_body(i, carry):
                g, h = carry
                c = c_ref[i]                              # scalar SMEM reads
                sw = sw_ref[i]
                csw = csw_ref[i]
                d = x - c
                e = jnp.exp((d * d) * neg_inv_2s2)        # EUP
                return g + sw * e, h + csw * e            # VPU

            g, h = lax.fori_loop(0, num_c, center_body,
                                 (jnp.zeros_like(x), jnp.zeros_like(x)),
                                 unroll=unroll)
            gp = (x * g - h) * neg_inv_s2                 # finalize, 3 ops/chunk
            g_ref[pl.ds(r0, _ROW_CHUNK), :] = g
            gp_ref[pl.ds(r0, _ROW_CHUNK), :] = gp
            gp2_ref[pl.ds(r0, _ROW_CHUNK), :] = gp * gp   # fused square

    call = pl.pallas_call(
        kernel,
        out_shape=(jax.ShapeDtypeStruct((rows, _LANE), jnp.float32),) * 3,
        grid=grid,
        in_specs=[
            pl.BlockSpec(memory_space=pltpu.MemorySpace.SMEM),   # sigma scalars
            pl.BlockSpec(memory_space=pltpu.MemorySpace.SMEM),   # centers
            pl.BlockSpec(memory_space=pltpu.MemorySpace.SMEM),   # signs*weights
            pl.BlockSpec(memory_space=pltpu.MemorySpace.SMEM),   # centers*signs*weights
            pl.BlockSpec((row_tile, _LANE), lambda i: (i, 0)),   # x (lane-dense)
        ],
        out_specs=(pl.BlockSpec((row_tile, _LANE), lambda i: (i, 0)),) * 3,
        compiler_params=pltpu.CompilerParams(
            dimension_semantics=("parallel",)),
    )

    @jax.jit
    def run(x_pad, centers, sw, csw, sigma):
        sigma = sigma.astype(jnp.float32)
        scal = jnp.stack([-1.0 / (2.0 * sigma * sigma),
                          -1.0 / (sigma * sigma)]).astype(jnp.float32)
        xp = x_pad.reshape(rows, _LANE)
        g, gp, gp2 = call(scal, centers, sw, csw, xp)
        return g.reshape(-1), gp.reshape(-1), gp2.reshape(-1)

    return run


def rbf_eval(x, centers, sw, csw, sigma):
    """Evaluate gaussian(x), g_(x), g_(x)**2 for a 1-D array of samples x."""
    x = jnp.asarray(x, jnp.float32).reshape(-1)
    n = int(x.shape[0])
    num_c = int(centers.shape[0])

    rows_raw = max(int(pl.cdiv(n, _LANE)), 1)
    if rows_raw <= _MAX_ROW_TILE:
        # power-of-two row buckets -> stable shapes across varying n
        rows = max(_ROW_CHUNK, int(pl.next_power_of_2(rows_raw)))
        # >= 2 parallel grid steps once the input spans >= 2 chunks (v7x megacore)
        row_tile = rows // 2 if rows >= 2 * _ROW_CHUNK else rows
    else:
        rows = ((rows_raw + _MAX_ROW_TILE - 1) // _MAX_ROW_TILE) * _MAX_ROW_TILE
        row_tile = _MAX_ROW_TILE

    fn = _build_rbf_fn(rows, row_tile, num_c)
    x_pad = jnp.zeros((rows * _LANE,), jnp.float32).at[:n].set(x)
    g, gp, gp2 = fn(x_pad, centers, sw, csw, jnp.asarray(sigma, jnp.float32))
    return g[:n], gp[:n], gp2[:n]


class RBFnetOpenV2Pallas:
    """JAX/Pallas re-implementation of RBFnet_openv2's forward pass."""

    def __init__(self, num_centers, action_limit, final_time, sigma=1.0,
                 key=None):
        # matches the PyTorch __init__ shapes (optimizer / loss fns omitted:
        # they do not affect the forward computation).
        self.num_centers = num_centers + 1
        self.final_time = final_time
        self.action_limit = action_limit
        self.sigma = jnp.float32(sigma)
        self.centers = jnp.linspace(0.0, float(final_time), num_centers,
                                    dtype=jnp.float32)
        if key is None:
            key = jax.random.PRNGKey(0)
        self.weights = jax.random.uniform(key, (num_centers,),
                                          dtype=jnp.float32)
        signs = np.array([(-1.0) ** (i + 1) for i in range(num_centers)],
                         dtype=np.float32)
        signs[0] = 0.0
        self.signs = jnp.asarray(signs)
        self.w1 = jnp.float32(1.0)

        # Fold weights into signs and drop zero-weight centers once, host-side.
        # (Forward-only module: weights are fixed after construction.)
        c_np = np.asarray(jax.device_get(self.centers), dtype=np.float32)
        sw_np = signs * np.asarray(jax.device_get(self.weights),
                                   dtype=np.float32)
        keep = sw_np != 0.0
        if np.any(keep):
            c_np, sw_np = c_np[keep], sw_np[keep]
        else:
            c_np, sw_np = c_np[:1], np.zeros((1,), np.float32)
        self._act_centers = jnp.asarray(c_np, jnp.float32)
        self._act_sw = jnp.asarray(sw_np, jnp.float32)
        self._act_csw = jnp.asarray(c_np * sw_np, jnp.float32)

        # mirrors `self.net = self.forward(torch.linspace(0, T, 1000*T))`
        self.net = self.forward(
            jnp.linspace(0.0, float(final_time), 1000 * int(final_time),
                         dtype=jnp.float32))

    # --- kernel-backed primitives -------------------------------------
    def _eval(self, x):
        return rbf_eval(x, self._act_centers, self._act_sw, self._act_csw,
                        self.sigma)

    def gaussian(self, x):
        g, _, _ = self._eval(jnp.atleast_1d(jnp.asarray(x, jnp.float32)))
        return g

    def g_(self, x):
        _, gp, _ = self._eval(jnp.atleast_1d(jnp.asarray(x, jnp.float32)))
        return gp

    # --- forward pass ---------------------------------------------------
    def forward(self, x):
        x = jnp.atleast_1d(jnp.asarray(x, jnp.float32))
        n_x = int(x.shape[0])
        points = jnp.linspace(0.0, float(self.final_time),
                              self.num_centers * 6, dtype=jnp.float32)

        # Single kernel launch covers both the user samples x and the extrema
        # probe grid `points`; g, g' and g'^2 all come back from the same call.
        combined = jnp.concatenate([x, points])
        g_all, gp_all, gp2_all = self._eval(combined)

        G = g_all[:n_x]

        # Single host sync for everything the numpy glue below needs.
        G_pts_np, gp2_x_np, x_np, points_np = jax.device_get(
            (g_all[n_x:], gp2_all[:n_x], x, points))

        # scipy maximum_filter / minimum_filter (size=3, mode='reflect') on a
        # 1-D signal == sliding window of 3 with edge padding.
        # TODO(synk): extrema detection + argwhere produce dynamic shapes;
        # kept host-side in numpy (no clean Pallas equivalent).
        padded = np.pad(G_pts_np, 1, mode="edge")
        win_max = np.maximum(np.maximum(padded[:-2], padded[1:-1]), padded[2:])
        win_min = np.minimum(np.minimum(padded[:-2], padded[1:-1]), padded[2:])
        maxima = np.argwhere(win_max == G_pts_np)[:, 0]
        minima = np.argwhere(win_min == G_pts_np)[:, 0]
        self.m = np.sort(np.concatenate([maxima, minima]))

        self.maxmin = points_np[self.m]
        self.true_centers = self.maxmin
        # maxmin is a subset of `points`, so gaussian(maxmin) == g(points)[m]
        # (reuses the kernel output instead of another launch).
        self.ordinate = jnp.asarray(G_pts_np[self.m])
        self.ordinate_prime = gp2_all[n_x:]          # g_(points) ** 2, fused in-kernel
        self.actions = self._calculate_integrals_vel_np(
            np.asarray(x_np), np.asarray(gp2_x_np), self.maxmin)
        return G

    def calculate_integrals_vel(self, x, int_centers):
        # standalone entry point (forward() uses the precomputed-g'^2 path).
        x_j = jnp.atleast_1d(jnp.asarray(x, jnp.float32))
        _, _, gp2 = self._eval(x_j)
        x_np, gp2_np = jax.device_get((x_j, gp2))
        return self._calculate_integrals_vel_np(
            np.asarray(x_np), np.asarray(gp2_np), np.asarray(int_centers))

    @staticmethod
    def _calculate_integrals_vel_np(x_np, gp2_np, int_centers):
        # TODO(synk): per-interval masked trapezoid integration has
        # dynamic-length slices; done host-side on kernel outputs.
        out = []
        for i in range(len(int_centers) - 1):
            mask = ~((x_np >= int_centers[i]) ^ (x_np < int_centers[i + 1]))
            pts = x_np[mask]
            if len(pts) == 0:
                out.append(np.float32(0.0))
            else:
                y = gp2_np[mask]
                trap = np.sum((y[1:] + y[:-1]) * np.diff(pts)) * 0.5
                out.append(np.float32(
                    trap / (int_centers[i + 1] - int_centers[i])))
        return out


if __name__ == "__main__":
    key = jax.random.PRNGKey(0)
    k_weights, k_x = jax.random.split(key)

    num_centers = 8
    final_time = 2
    net = RBFnetOpenV2Pallas(num_centers=num_centers, action_limit=1.0,
                             final_time=final_time, sigma=1.0, key=k_weights)

    # small deterministic set of time samples in [0, final_time]
    x = jnp.sort(jax.random.uniform(k_x, (200,), dtype=jnp.float32)
                 * float(final_time))

    G = net.forward(x)
    jax.block_until_ready(G)
    G_np = np.asarray(jax.device_get(G))
    assert G.shape == x.shape and G.dtype == jnp.float32
    assert np.all(np.isfinite(G_np))

    # numpy reference check of the kernel-computed gaussian(x) and g_(x)
    xr = np.asarray(jax.device_get(x))[:, None]
    cr = np.asarray(jax.device_get(net.centers))[None, :]
    sr = np.asarray(jax.device_get(net.signs))[None, :]
    wr = np.asarray(jax.device_get(net.weights))
    sig = float(net.sigma)
    basis = np.exp(-(xr - cr) ** 2 / (2.0 * sig ** 2))
    ref_g = (basis * sr) @ wr
    ref_gp = ((-(xr - cr) / sig ** 2) * basis * sr) @ wr
    assert np.allclose(G_np, ref_g, atol=1e-5, rtol=1e-5)
    gp_np = np.asarray(jax.device_get(net.g_(x)))
    assert np.allclose(gp_np, ref_gp, atol=1e-4, rtol=1e-4)
    print("KERNEL_OK")
</pallas_src>

<mosaic_0001>
module attributes {stable_mosaic.version = 11 : i64} {
  func.func @kernel(%arg0: i32, %arg1: memref<2xf32, #tpu.memory_space<smem>>, %arg2: memref<7xf32, #tpu.memory_space<smem>>, %arg3: memref<7xf32, #tpu.memory_space<smem>>, %arg4: memref<7xf32, #tpu.memory_space<smem>>, %arg5: memref<32x128xf32, #tpu.memory_space<vmem>>, %arg6: memref<32x128xf32, #tpu.memory_space<vmem>>, %arg7: memref<32x128xf32, #tpu.memory_space<vmem>>, %arg8: memref<32x128xf32, #tpu.memory_space<vmem>>) attributes {dimension_semantics = [#tpu.dimension_semantics<parallel>], iteration_bounds = array<i64: 1>, scalar_prefetch = 0 : i64, scratch_operands = 0 : i64, tpu.core_type = #tpu.core_type<tc>, window_params = [{transform_indices = @transform_0, window_bounds = array<i64: 2>}, {transform_indices = @transform_1, window_bounds = array<i64: 7>}, {transform_indices = @transform_2, window_bounds = array<i64: 7>}, {transform_indices = @transform_3, window_bounds = array<i64: 7>}, {transform_indices = @transform_4, window_bounds = array<i64: 32, 128>}, {transform_indices = @transform_5, window_bounds = array<i64: 32, 128>}, {transform_indices = @transform_6, window_bounds = array<i64: 32, 128>}, {transform_indices = @transform_7, window_bounds = array<i64: 32, 128>}]} {
    %c0 = arith.constant 0 : index
    %0 = memref.load %arg1[%c0] : memref<2xf32, #tpu.memory_space<smem>>
    %c1 = arith.constant 1 : index
    %1 = memref.load %arg1[%c1] : memref<2xf32, #tpu.memory_space<smem>>
    %c0_i32 = arith.constant 0 : i32
    %c1_i32 = arith.constant 1 : i32
    %2 = arith.muli %c0_i32, %c1_i32 : i32
    %c0_i32_0 = arith.constant 0 : i32
    %3 = arith.addi %c0_i32_0, %2 : i32
    %c32_i32 = arith.constant 32 : i32
    %4 = arith.muli %3, %c32_i32 : i32
    %5 = tpu.assume_multiple %4, 32 : i32
    %6 = arith.index_cast %5 : i32 to index
    %c0_1 = arith.constant 0 : index
    %7 = vector.load %arg5[%6, %c0_1] : memref<32x128xf32, #tpu.memory_space<vmem>>, vector<32x128xf32>
    %cst = arith.constant 0.000000e+00 : f32
    %8 = vector.broadcast %cst : f32 to vector<32x128xf32>
    %cst_2 = arith.constant 0.000000e+00 : f32
    %9 = vector.broadcast %cst_2 : f32 to vector<32x128xf32>
    %c0_i32_3 = arith.constant 0 : i32
    %10 = arith.index_cast %c0_i32_3 : i32 to index
    %11 = memref.load %arg2[%10] : memref<7xf32, #tpu.memory_space<smem>>
    %12 = arith.index_cast %c0_i32_3 : i32 to index
    %13 = memref.load %arg3[%12] : memref<7xf32, #tpu.memory_space<smem>>
    %14 = arith.index_cast %c0_i32_3 : i32 to index
    %15 = memref.load %arg4[%14] : memref<7xf32, #tpu.memory_space<smem>>
    %16 = vector.broadcast %11 : f32 to vector<32x128xf32>
    %17 = arith.subf %7, %16 : vector<32x128xf32>
    %18 = arith.mulf %17, %17 : vector<32x128xf32>
    %19 = vector.broadcast %0 : f32 to vector<32x128xf32>
    %20 = arith.mulf %18, %19 : vector<32x128xf32>
    %21 = math.exp %20 : vector<32x128xf32>
    %22 = vector.broadcast %13 : f32 to vector<32x128xf32>
    %23 = arith.mulf %22, %21 : vector<32x128xf32>
    %24 = arith.addf %8, %23 : vector<32x128xf32>
    %25 = vector.broadcast %15 : f32 to vector<32x128xf32>
    %26 = arith.mulf %25, %21 : vector<32x128xf32>
    %27 = arith.addf %9, %26 : vector<32x128xf32>
    %c1_i32_4 = arith.constant 1 : i32
    %28 = arith.index_cast %c1_i32_4 : i32 to index
    %29 = memref.load %arg2[%28] : memref<7xf32, #tpu.memory_space<smem>>
    %30 = arith.index_cast %c1_i32_4 : i32 to index
    %31 = memref.load %arg3[%30] : memref<7xf32, #tpu.memory_space<smem>>
    %32 = arith.index_cast %c1_i32_4 : i32 to index
    %33 = memref.load %arg4[%32] : memref<7xf32, #tpu.memory_space<smem>>
    %34 = vector.broadcast %29 : f32 to vector<32x128xf32>
    %35 = arith.subf %7, %34 : vector<32x128xf32>
    %36 = arith.mulf %35, %35 : vector<32x128xf32>
    %37 = vector.broadcast %0 : f32 to vector<32x128xf32>
    %38 = arith.mulf %36, %37 : vector<32x128xf32>
    %39 = math.exp %38 : vector<32x128xf32>
    %40 = vector.broadcast %31 : f32 to vector<32x128xf32>
    %41 = arith.mulf %40, %39 : vector<32x128xf32>
    %42 = arith.addf %24, %41 : vector<32x128xf32>
    %43 = vector.broadcast %33 : f32 to vector<32x128xf32>
    %44 = arith.mulf %43, %39 : vector<32x128xf32>
    %45 = arith.addf %27, %44 : vector<32x128xf32>
    %c2_i32 = arith.constant 2 : i32
    %46 = arith.index_cast %c2_i32 : i32 to index
    %47 = memref.load %arg2[%46] : memref<7xf32, #tpu.memory_space<smem>>
    %48 = arith.index_cast %c2_i32 : i32 to index
    %49 = memref.load %arg3[%48] : memref<7xf32, #tpu.memory_space<smem>>
    %50 = arith.index_cast %c2_i32 : i32 to index
    %51 = memref.load %arg4[%50] : memref<7xf32, #tpu.memory_space<smem>>
    %52 = vector.broadcast %47 : f32 to vector<32x128xf32>
    %53 = arith.subf %7, %52 : vector<32x128xf32>
    %54 = arith.mulf %53, %53 : vector<32x128xf32>
    %55 = vector.broadcast %0 : f32 to vector<32x128xf32>
    %56 = arith.mulf %54, %55 : vector<32x128xf32>
    %57 = math.exp %56 : vector<32x128xf32>
    %58 = vector.broadcast %49 : f32 to vector<32x128xf32>
    %59 = arith.mulf %58, %57 : vector<32x128xf32>
    %60 = arith.addf %42, %59 : vector<32x128xf32>
    %61 = vector.broadcast %51 : f32 to vector<32x128xf32>
    %62 = arith.mulf %61, %57 : vector<32x128xf32>
    %63 = arith.addf %45, %62 : vector<32x128xf32>
    %c3_i32 = arith.constant 3 : i32
    %64 = arith.index_cast %c3_i32 : i32 to index
    %65 = memref.load %arg2[%64] : memref<7xf32, #tpu.memory_space<smem>>
    %66 = arith.index_cast %c3_i32 : i32 to index
    %67 = memref.load %arg3[%66] : memref<7xf32, #tpu.memory_space<smem>>
    %68 = arith.index_cast %c3_i32 : i32 to index
    %69 = memref.load %arg4[%68] : memref<7xf32, #tpu.memory_space<smem>>
    %70 = vector.broadcast %65 : f32 to vector<32x128xf32>
    %71 = arith.subf %7, %70 : vector<32x128xf32>
    %72 = arith.mulf %71, %71 : vector<32x128xf32>
    %73 = vector.broadcast %0 : f32 to vector<32x128xf32>
    %74 = arith.mulf %72, %73 : vector<32x128xf32>
    %75 = math.exp %74 : vector<32x128xf32>
    %76 = vector.broadcast %67 : f32 to vector<32x128xf32>
    %77 = arith.mulf %76, %75 : vector<32x128xf32>
    %78 = arith.addf %60, %77 : vector<32x128xf32>
    %79 = vector.broadcast %69 : f32 to vector<32x128xf32>
    %80 = arith.mulf %79, %75 : vector<32x128xf32>
    %81 = arith.addf %63, %80 : vector<32x128xf32>
    %c4_i32 = arith.constant 4 : i32
    %82 = arith.index_cast %c4_i32 : i32 to index
    %83 = memref.load %arg2[%82] : memref<7xf32, #tpu.memory_space<smem>>
    %84 = arith.index_cast %c4_i32 : i32 to index
    %85 = memref.load %arg3[%84] : memref<7xf32, #tpu.memory_space<smem>>
    %86 = arith.index_cast %c4_i32 : i32 to index
    %87 = memref.load %arg4[%86] : memref<7xf32, #tpu.memory_space<smem>>
    %88 = vector.broadcast %83 : f32 to vector<32x128xf32>
    %89 = arith.subf %7, %88 : vector<32x128xf32>
    %90 = arith.mulf %89, %89 : vector<32x128xf32>
    %91 = vector.broadcast %0 : f32 to vector<32x128xf32>
    %92 = arith.mulf %90, %91 : vector<32x128xf32>
    %93 = math.exp %92 : vector<32x128xf32>
    %94 = vector.broadcast %85 : f32 to vector<32x128xf32>
    %95 = arith.mulf %94, %93 : vector<32x128xf32>
    %96 = arith.addf %78, %95 : vector<32x128xf32>
    %97 = vector.broadcast %87 : f32 to vector<32x128xf32>
    %98 = arith.mulf %97, %93 : vector<32x128xf32>
    %99 = arith.addf %81, %98 : vector<32x128xf32>
    %c5_i32 = arith.constant 5 : i32
    %100 = arith.index_cast %c5_i32 : i32 to index
    %101 = memref.load %arg2[%100] : memref<7xf32, #tpu.memory_space<smem>>
    %102 = arith.index_cast %c5_i32 : i32 to index
    %103 = memref.load %arg3[%102] : memref<7xf32, #tpu.memory_space<smem>>
    %104 = arith.index_cast %c5_i32 : i32 to index
    %105 = memref.load %arg4[%104] : memref<7xf32, #tpu.memory_space<smem>>
    %106 = vector.broadcast %101 : f32 to vector<32x128xf32>
    %107 = arith.subf %7, %106 : vector<32x128xf32>
    %108 = arith.mulf %107, %107 : vector<32x128xf32>
    %109 = vector.broadcast %0 : f32 to vector<32x128xf32>
    %110 = arith.mulf %108, %109 : vector<32x128xf32>
    %111 = math.exp %110 : vector<32x128xf32>
    %112 = vector.broadcast %103 : f32 to vector<32x128xf32>
    %113 = arith.mulf %112, %111 : vector<32x128xf32>
    %114 = arith.addf %96, %113 : vector<32x128xf32>
    %115 = vector.broadcast %105 : f32 to vector<32x128xf32>
    %116 = arith.mulf %115, %111 : vector<32x128xf32>
    %117 = arith.addf %99, %116 : vector<32x128xf32>
    %c6_i32 = arith.constant 6 : i32
    %118 = arith.index_cast %c6_i32 : i32 to index
    %119 = memref.load %arg2[%118] : memref<7xf32, #tpu.memory_space<smem>>
    %120 = arith.index_cast %c6_i32 : i32 to index
    %121 = memref.load %arg3[%120] : memref<7xf32, #tpu.memory_space<smem>>
    %122 = arith.index_cast %c6_i32 : i32 to index
    %123 = memref.load %arg4[%122] : memref<7xf32, #tpu.memory_space<smem>>
    %124 = vector.broadcast %119 : f32 to vector<32x128xf32>
    %125 = arith.subf %7, %124 : vector<32x128xf32>
    %126 = arith.mulf %125, %125 : vector<32x128xf32>
    %127 = vector.broadcast %0 : f32 to vector<32x128xf32>
    %128 = arith.mulf %126, %127 : vector<32x128xf32>
    %129 = math.exp %128 : vector<32x128xf32>
    %130 = vector.broadcast %121 : f32 to vector<32x128xf32>
    %131 = arith.mulf %130, %129 : vector<32x128xf32>
    %132 = arith.addf %114, %131 : vector<32x128xf32>
    %133 = vector.broadcast %123 : f32 to vector<32x128xf32>
    %134 = arith.mulf %133, %129 : vector<32x128xf32>
    %135 = arith.addf %117, %134 : vector<32x128xf32>
    %c7_i32 = arith.constant 7 : i32
    %136 = arith.mulf %7, %132 : vector<32x128xf32>
    %137 = arith.subf %136, %135 : vector<32x128xf32>
    %138 = vector.broadcast %1 : f32 to vector<32x128xf32>
    %139 = arith.mulf %137, %138 : vector<32x128xf32>
    %140 = arith.index_cast %5 : i32 to index
    %c0_5 = arith.constant 0 : index
    %141 = vector.load %arg6[%140, %c0_5] : memref<32x128xf32, #tpu.memory_space<vmem>>, vector<32x128xf32>
    tpu.vector_store %arg6[%140, %c0_5], %132 {strides = array<i32>} : memref<32x128xf32, #tpu.memory_space<vmem>>, vector<32x128xf32>,
    %142 = arith.index_cast %5 : i32 to index
    %c0_6 = arith.constant 0 : index
    %143 = vector.load %arg7[%142, %c0_6] : memref<32x128xf32, #tpu.memory_space<vmem>>, vector<32x128xf32>
    tpu.vector_store %arg7[%142, %c0_6], %139 {strides = array<i32>} : memref<32x128xf32, #tpu.memory_space<vmem>>, vector<32x128xf32>,
    %144 = arith.mulf %139, %139 : vector<32x128xf32>
    %145 = arith.index_cast %5 : i32 to index
    %c0_7 = arith.constant 0 : index
    %146 = vector.load %arg8[%145, %c0_7] : memref<32x128xf32, #tpu.memory_space<vmem>>, vector<32x128xf32>
    tpu.vector_store %arg8[%145, %c0_7], %144 {strides = array<i32>} : memref<32x128xf32, #tpu.memory_space<vmem>>, vector<32x128xf32>,
    %c1_i32_8 = arith.constant 1 : i32
    return
  }
  func.func @transform_0(%arg0: i32) -> i32 {
    %c0_i32 = arith.constant 0 : i32
    %c0_i32_0 = arith.constant 0 : i32
    return %c0_i32 : i32
  }
  func.func @transform_1(%arg0: i32) -> i32 {
    %c0_i32 = arith.constant 0 : i32
    %c0_i32_0 = arith.constant 0 : i32
    return %c0_i32 : i32
  }
  func.func @transform_2(%arg0: i32) -> i32 {
    %c0_i32 = arith.constant 0 : i32
    %c0_i32_0 = arith.constant 0 : i32
    return %c0_i32 : i32
  }
  func.func @transform_3(%arg0: i32) -> i32 {
    %c0_i32 = arith.constant 0 : i32
    %c0_i32_0 = arith.constant 0 : i32
    return %c0_i32 : i32
  }
  func.func @transform_4(%arg0: i32) -> (i32, i32) {
    %c0_i32 = arith.constant 0 : i32
    %c0_i32_0 = arith.constant 0 : i32
    return %arg0, %c0_i32 : i32, i32
  }
  func.func @transform_5(%arg0: i32) -> (i32, i32) {
    %c0_i32 = arith.constant 0 : i32
    %c0_i32_0 = arith.constant 0 : i32
    return %arg0, %c0_i32 : i32, i32
  }
  func.func @transform_6(%arg0: i32) -> (i32, i32) {
    %c0_i32 = arith.constant 0 : i32
    %c0_i32_0 = arith.constant 0 : i32
    return %arg0, %c0_i32 : i32, i32
  }
  func.func @transform_7(%arg0: i32) -> (i32, i32) {
    %c0_i32 = arith.constant 0 : i32
    %c0_i32_0 = arith.constant 0 : i32
    return %arg0, %c0_i32 : i32, i32
  }
}

</mosaic_0001>

<llo_original>
// kernel: run.1
$region0: #{run.1}
  #allocation0 [shape = 'u32[]', space=smem, size = 0x4, offset = 0x4, fixed_abs, tag = 'smem constant byte address 0x4 - core index']
  #allocation1 [shape = 'u32[144,128]{1,0:T(1,128)}', space=vmem, size = 0x12000, scoped, tag = 'internal scratch']
  %s0 = inlined_call_operand.vmem [shape: f32[2], index: 0, kind: input, shape index: {}]
  %s1 = inlined_call_operand.vmem [shape: f32[7], index: 1, kind: input, shape index: {}]
  %s2 = inlined_call_operand.vmem [shape: f32[7], index: 2, kind: input, shape index: {}]
  %s3 = inlined_call_operand.vmem [shape: f32[7], index: 3, kind: input, shape index: {}]
  %s4 = inlined_call_operand.vmem [shape: f32[32,128], index: 4, kind: input, shape index: {}]
  %s5 = inlined_call_operand.hbm [shape: f32[32,128], index: 5, kind: output, shape index: {0}]
  %s6 = inlined_call_operand.hbm [shape: f32[32,128], index: 6, kind: output, shape index: {1}]
  %s7 = inlined_call_operand.hbm [shape: f32[32,128], index: 7, kind: output, shape index: {2}]
  %8 = xla_tuple %s5, %s6, %s7
  %s9 = sld [smem:[#allocation0]]
  $region62: #{run.1} parent=0
    _
  %s11 = ssub.s32 1, %s9
  %s12 = scalar_select 0, %s11, %s9
  $region1: #{run.1} parent=0
    #allocation2 [shape = 'u8[512]{0}', space=smem, size = 0x200, scoped, tag = 'input window, operand 0, single buffered']
    #allocation3 [shape = 's32[1]{0}', space=sflag, size = 0x4, scoped, tag = 'scoped memory for run.1']
    #allocation4 [shape = 's32[1]{0}', space=sflag, size = 0x4, scoped, tag = 'scoped memory for run.1']
    #allocation5 [shape = 'u8[512]{0}', space=smem, size = 0x200, scoped, tag = 'input window, operand 1, single buffered']
    #allocation6 [shape = 's32[1]{0}', space=sflag, size = 0x4, scoped, tag = 'scoped memory for run.1']
    #allocation7 [shape = 'u8[512]{0}', space=smem, size = 0x200, scoped, tag = 'input window, operand 2, single buffered']
    #allocation8 [shape = 'u8[512]{0}', space=smem, size = 0x200, scoped, tag = 'input window, operand 3, single buffered']
    #allocation9 [shape = 's32[1]{0}', space=sflag, size = 0x4, scoped, tag = 'scoped memory for run.1']
    #allocation10 [shape = 'u8[16384]{0}', space=vmem, size = 0x4000, scoped, tag = 'output window, operand 0, single buffered']
    #allocation11 [shape = 'u8[16384]{0}', space=vmem, size = 0x4000, scoped, tag = 'output window, operand 1, single buffered']
    #allocation12 [shape = 's32[1]{0}', space=sflag, size = 0x4, scoped, tag = 'scoped memory for run.1']
    #allocation13 [shape = 'u8[16384]{0}', space=vmem, size = 0x4000, scoped, tag = 'output window, operand 2, single buffered']
    %13 = vsyncpa [#allocation4], 0
    %14 = vsyncpa [#allocation6], 0
    %15 = vsyncpa [#allocation9], 0
    %16 = vsyncpa [#allocation3], 0
    %17 = vsyncpa [#allocation12], 0
    // Predicated region
    $region2: #{run.1} parent=1 // pred_check
      _
    $region3: #{run.1} parent=1 // pred_check_branch
      %19 = sbr.rel (0) target = $region5
    $region4: #{run.1} parent=1 // pred_region
      %s21 = ssub.s32 16, 16
      %22 = vsyncadd [#allocation4], %s21
      %s24 = sshll.u32 %s0, 4
      %s25 = int_to_ptr.vmem [resolvable:$true] %s24
      %27 = dma.vmem_to_smem %s25, 16, [#allocation2], [#allocation4]
    $region5: #{run.1} parent=1 // pred_fallthru
      _
    // Predicated region
    $region6: #{run.1} parent=1 // pred_check
      _
    $region7: #{run.1} parent=1 // pred_check_branch
      %29 = sbr.rel (0) target = $region9
    $region8: #{run.1} parent=1 // pred_region
      %s31 = ssub.s32 16, 16
      %32 = vsyncadd [#allocation6], %s31
      %s34 = sshll.u32 %s1, 4
      %s35 = int_to_ptr.vmem [resolvable:$true] %s34
      %37 = dma.vmem_to_smem %s35, 16, [#allocation5], [#allocation6]
    $region9: #{run.1} parent=1 // pred_fallthru
      _
    // Predicated region
    $region10: #{run.1} parent=1 // pred_check
      _
    $region11: #{run.1} parent=1 // pred_check_branch
      %39 = sbr.rel (0) target = $region13
    $region12: #{run.1} parent=1 // pred_region
      %s41 = ssub.s32 16, 16
      %42 = vsyncadd [#allocation6], %s41
      %s44 = sshll.u32 %s2, 4
      %s45 = int_to_ptr.vmem [resolvable:$true] %s44
      %47 = dma.vmem_to_smem %s45, 16, [#allocation7], [#allocation6]
    $region13: #{run.1} parent=1 // pred_fallthru
      _
    // Predicated region
    $region14: #{run.1} parent=1 // pred_check
      _
    $region15: #{run.1} parent=1 // pred_check_branch
      %49 = sbr.rel (0) target = $region17
    $region16: #{run.1} parent=1 // pred_region
      %s51 = ssub.s32 16, 16
      %52 = vsyncadd [#allocation9], %s51
      %s54 = sshll.u32 %s3, 4
      %s55 = int_to_ptr.vmem [resolvable:$true] %s54
      %57 = dma.vmem_to_smem %s55, 16, [#allocation8], [#allocation9]
    $region17: #{run.1} parent=1 // pred_fallthru
      _
    // Predicated region
    $region18: #{run.1} parent=1 // pred_check
      _
    $region19: #{run.1} parent=1 // pred_check_branch
      %59 = sbr.rel (0) target = $region21
    $region20: #{run.1} parent=1 // pred_region
      _
    $region21: #{run.1} parent=1 // pred_fallthru
      _
    // Predicated region
    $region22: #{run.1} parent=1 // pred_check
      _
    $region23: #{run.1} parent=1 // pred_check_branch
      %61 = sbr.rel (0) target = $region25
    $region24: #{run.1} parent=1 // pred_region
      %62 = dma.done [#allocation4], 16
    $region25: #{run.1} parent=1 // pred_fallthru
      _
    // Predicated region
    $region26: #{run.1} parent=1 // pred_check
      _
    $region27: #{run.1} parent=1 // pred_check_branch
      %64 = sbr.rel (0) target = $region29
    $region28: #{run.1} parent=1 // pred_region
      %65 = dma.done [#allocation6], 16
    $region29: #{run.1} parent=1 // pred_fallthru
      _
    // Predicated region
    $region30: #{run.1} parent=1 // pred_check
      _
    $region31: #{run.1} parent=1 // pred_check_branch
      %67 = sbr.rel (0) target = $region33
    $region32: #{run.1} parent=1 // pred_region
      %68 = dma.done [#allocation6], 16
    $region33: #{run.1} parent=1 // pred_fallthru
      _
    // Predicated region
    $region34: #{run.1} parent=1 // pred_check
      _
    $region35: #{run.1} parent=1 // pred_check_branch
      %70 = sbr.rel (0) target = $region37
    $region36: #{run.1} parent=1 // pred_region
      %71 = dma.done [#allocation9], 16
    $region37: #{run.1} parent=1 // pred_fallthru
      _
    %72 = sfence
    %s73 = sld [smem:[#allocation2]]
    %s74 = sld [smem:[#allocation2 + $0x1]]
    %v75 = vld [vmem:[%s4] sm:$0xff]
    %v76 = vld [vmem:[%s4 + $0x8] sm:$0xff]
    %v77 = vld [vmem:[%s4 + $0x10] sm:$0xff]
    %v78 = vld [vmem:[%s4 + $0x18] sm:$0xff]
    %s79 = sld [smem:[#allocation5]]
    %s80 = sld [smem:[#allocation7]]
    %s81 = sld [smem:[#allocation8]]
    %v82 = vstv %s79
    %v83 = vsub.f32 %v75, %v82
    %v84 = vsub.f32 %v76, %v82
    %v85 = vsub.f32 %v77, %v82
    %v86 = vsub.f32 %v78, %v82
    %v87 = vmul.f32 %v83, %v83
    %v88 = vmul.f32 %v84, %v84
    %v89 = vmul.f32 %v85, %v85
    %v90 = vmul.f32 %v86, %v86
    %v91 = vstv %s73
    %v92 = vmul.f32 %v87, %v91
    %v93 = vmul.f32 %v88, %v91
    %v94 = vmul.f32 %v89, %v91
    %v95 = vmul.f32 %v90, %v91
    %v96 = vmul.f32 %v92, 1.442695
    %v97 = vpow.pop %v96
    %v98 = vmul.f32 %v93, 1.442695
    %v99 = vpow.pop %v98
    %v100 = vmul.f32 %v94, 1.442695
    %v101 = vpow.pop %v100
    %v102 = vmul.f32 %v95, 1.442695
    %v103 = vpow.pop %v102
    %v104 = vstv %s80
    %v105 = vmul.f32 %v104, %v97
    %v106 = vmul.f32 %v104, %v99
    %v107 = vmul.f32 %v104, %v101
    %v108 = vmul.f32 %v104, %v103
    %v109 = vadd.f32 %v105, 0.0
    %v110 = vadd.f32 %v106, 0.0
    %v111 = vadd.f32 %v107, 0.0
    %v112 = vadd.f32 %v108, 0.0
    %v113 = vstv %s81
    %v114 = vmul.f32 %v113, %v97
    %v115 = vmul.f32 %v113, %v99
    %v116 = vmul.f32 %v113, %v101
    %v117 = vmul.f32 %v113, %v103
    %v118 = vadd.f32 %v114, 0.0
    %v119 = vadd.f32 %v115, 0.0
    %v120 = vadd.f32 %v116, 0.0
    %v121 = vadd.f32 %v117, 0.0
    %s122 = sld [smem:[#allocation5 + $0x1]]
    %s123 = sld [smem:[#allocation7 + $0x1]]
    %s124 = sld [smem:[#allocation8 + $0x1]]
    %v125 = vstv %s122
    %v126 = vsub.f32 %v75, %v125
    %v127 = vsub.f32 %v76, %v125
    %v128 = vsub.f32 %v77, %v125
    %v129 = vsub.f32 %v78, %v125
    %v130 = vmul.f32 %v126, %v126
    %v131 = vmul.f32 %v127, %v127
    %v132 = vmul.f32 %v128, %v128
    %v133 = vmul.f32 %v129, %v129
    %v134 = vmul.f32 %v130, %v91
    %v135 = vmul.f32 %v131, %v91
    %v136 = vmul.f32 %v132, %v91
    %v137 = vmul.f32 %v133, %v91
    %v138 = vmul.f32 %v134, 1.442695
    %v139 = vpow.pop %v138
    %v140 = vmul.f32 %v135, 1.442695
    %v141 = vpow.pop %v140
    %v142 = vmul.f32 %v136, 1.442695
    %v143 = vpow.pop %v142
    %v144 = vmul.f32 %v137, 1.442695
    %v145 = vpow.pop %v144
    %v146 = vstv %s123
    %v147 = vmul.f32 %v146, %v139
    %v148 = vmul.f32 %v146, %v141
    %v149 = vmul.f32 %v146, %v143
    %v150 = vmul.f32 %v146, %v145
    %v151 = vadd.f32 %v109, %v147
    %v152 = vadd.f32 %v110, %v148
    %v153 = vadd.f32 %v111, %v149
    %v154 = vadd.f32 %v112, %v150
    %v155 = vstv %s124
    %v156 = vmul.f32 %v155, %v139
    %v157 = vmul.f32 %v155, %v141
    %v158 = vmul.f32 %v155, %v143
    %v159 = vmul.f32 %v155, %v145
    %v160 = vadd.f32 %v118, %v156
    %v161 = vadd.f32 %v119, %v157
    %v162 = vadd.f32 %v120, %v158
    %v163 = vadd.f32 %v121, %v159
    %s164 = sld [smem:[#allocation5 + $0x2]]
    %s165 = sld [smem:[#allocation7 + $0x2]]
    %s166 = sld [smem:[#allocation8 + $0x2]]
    %v167 = vstv %s164
    %v168 = vsub.f32 %v75, %v167
    %v169 = vsub.f32 %v76, %v167
    %v170 = vsub.f32 %v77, %v167
    %v171 = vsub.f32 %v78, %v167
    %v172 = vmul.f32 %v168, %v168
    %v173 = vmul.f32 %v169, %v169
    %v174 = vmul.f32 %v170, %v170
    %v175 = vmul.f32 %v171, %v171
    %v176 = vmul.f32 %v172, %v91
    %v177 = vmul.f32 %v173, %v91
    %v178 = vmul.f32 %v174, %v91
    %v179 = vmul.f32 %v175, %v91
    %v180 = vmul.f32 %v176, 1.442695
    %v181 = vpow.pop %v180
    %v182 = vmul.f32 %v177, 1.442695
    %v183 = vpow.pop %v182
    %v184 = vmul.f32 %v178, 1.442695
    %v185 = vpow.pop %v184
    %v186 = vmul.f32 %v179, 1.442695
    %v187 = vpow.pop %v186
    %v188 = vstv %s165
    %v189 = vmul.f32 %v188, %v181
    %v190 = vmul.f32 %v188, %v183
    %v191 = vmul.f32 %v188, %v185
    %v192 = vmul.f32 %v188, %v187
    %v193 = vadd.f32 %v151, %v189
    %v194 = vadd.f32 %v152, %v190
    %v195 = vadd.f32 %v153, %v191
    %v196 = vadd.f32 %v154, %v192
    %v197 = vstv %s166
    %v198 = vmul.f32 %v197, %v181
    %v199 = vmul.f32 %v197, %v183
    %v200 = vmul.f32 %v197, %v185
    %v201 = vmul.f32 %v197, %v187
    %v202 = vadd.f32 %v160, %v198
    %v203 = vadd.f32 %v161, %v199
    %v204 = vadd.f32 %v162, %v200
    %v205 = vadd.f32 %v163, %v201
    %s206 = sld [smem:[#allocation5 + $0x3]]
    %s207 = sld [smem:[#allocation7 + $0x3]]
    %s208 = sld [smem:[#allocation8 + $0x3]]
    %v209 = vstv %s206
    %v210 = vsub.f32 %v75, %v209
    %v211 = vsub.f32 %v76, %v209
    %v212 = vsub.f32 %v77, %v209
    %v213 = vsub.f32 %v78, %v209
    %v214 = vmul.f32 %v210, %v210
    %v215 = vmul.f32 %v211, %v211
    %v216 = vmul.f32 %v212, %v212
    %v217 = vmul.f32 %v213, %v213
    %v218 = vmul.f32 %v214, %v91
    %v219 = vmul.f32 %v215, %v91
    %v220 = vmul.f32 %v216, %v91
    %v221 = vmul.f32 %v217, %v91
    %v222 = vmul.f32 %v218, 1.442695
    %v223 = vpow.pop %v222
    %v224 = vmul.f32 %v219, 1.442695
    %v225 = vpow.pop %v224
    %v226 = vmul.f32 %v220, 1.442695
    %v227 = vpow.pop %v226
    %v228 = vmul.f32 %v221, 1.442695
    %v229 = vpow.pop %v228
    %v230 = vstv %s207
    %v231 = vmul.f32 %v230, %v223
    %v232 = vmul.f32 %v230, %v225
    %v233 = vmul.f32 %v230, %v227
    %v234 = vmul.f32 %v230, %v229
    %v235 = vadd.f32 %v193, %v231
    %v236 = vadd.f32 %v194, %v232
    %v237 = vadd.f32 %v195, %v233
    %v238 = vadd.f32 %v196, %v234
    %v239 = vstv %s208
    %v240 = vmul.f32 %v239, %v223
    %v241 = vmul.f32 %v239, %v225
    %v242 = vmul.f32 %v239, %v227
    %v243 = vmul.f32 %v239, %v229
    %v244 = vadd.f32 %v202, %v240
    %v245 = vadd.f32 %v203, %v241
    %v246 = vadd.f32 %v204, %v242
    %v247 = vadd.f32 %v205, %v243
    %s248 = sld [smem:[#allocation5 + $0x4]]
    %s249 = sld [smem:[#allocation7 + $0x4]]
    %s250 = sld [smem:[#allocation8 + $0x4]]
    %v251 = vstv %s248
    %v252 = vsub.f32 %v75, %v251
    %v253 = vsub.f32 %v76, %v251
    %v254 = vsub.f32 %v77, %v251
    %v255 = vsub.f32 %v78, %v251
    %v256 = vmul.f32 %v252, %v252
    %v257 = vmul.f32 %v253, %v253
    %v258 = vmul.f32 %v254, %v254
    %v259 = vmul.f32 %v255, %v255
    %v260 = vmul.f32 %v256, %v91
    %v261 = vmul.f32 %v257, %v91
    %v262 = vmul.f32 %v258, %v91
    %v263 = vmul.f32 %v259, %v91
    %v264 = vmul.f32 %v260, 1.442695
    %v265 = vpow.pop %v264
    %v266 = vmul.f32 %v261, 1.442695
    %v267 = vpow.pop %v266
    %v268 = vmul.f32 %v262, 1.442695
    %v269 = vpow.pop %v268
    %v270 = vmul.f32 %v263, 1.442695
    %v271 = vpow.pop %v270
    %v272 = vstv %s249
    %v273 = vmul.f32 %v272, %v265
    %v274 = vmul.f32 %v272, %v267
    %v275 = vmul.f32 %v272, %v269
    %v276 = vmul.f32 %v272, %v271
    %v277 = vadd.f32 %v235, %v273
    %v278 = vadd.f32 %v236, %v274
    %v279 = vadd.f32 %v237, %v275
    %v280 = vadd.f32 %v238, %v276
    %v281 = vstv %s250
    %v282 = vmul.f32 %v281, %v265
    %v283 = vmul.f32 %v281, %v267
    %v284 = vmul.f32 %v281, %v269
    %v285 = vmul.f32 %v281, %v271
    %v286 = vadd.f32 %v244, %v282
    %v287 = vadd.f32 %v245, %v283
    %v288 = vadd.f32 %v246, %v284
    %v289 = vadd.f32 %v247, %v285
    %s290 = sld [smem:[#allocation5 + $0x5]]
    %s291 = sld [smem:[#allocation7 + $0x5]]
    %s292 = sld [smem:[#allocation8 + $0x5]]
    %v293 = vstv %s290
    %v294 = vsub.f32 %v75, %v293
    %v295 = vsub.f32 %v76, %v293
    %v296 = vsub.f32 %v77, %v293
    %v297 = vsub.f32 %v78, %v293
    %v298 = vmul.f32 %v294, %v294
    %v299 = vmul.f32 %v295, %v295
    %v300 = vmul.f32 %v296, %v296
    %v301 = vmul.f32 %v297, %v297
    %v302 = vmul.f32 %v298, %v91
    %v303 = vmul.f32 %v299, %v91
    %v304 = vmul.f32 %v300, %v91
    %v305 = vmul.f32 %v301, %v91
    %v306 = vmul.f32 %v302, 1.442695
    %v307 = vpow.pop %v306
    %v308 = vmul.f32 %v303, 1.442695
    %v309 = vpow.pop %v308
    %v310 = vmul.f32 %v304, 1.442695
    %v311 = vpow.pop %v310
    %v312 = vmul.f32 %v305, 1.442695
    %v313 = vpow.pop %v312
    %v314 = vstv %s291
    %v315 = vmul.f32 %v314, %v307
    %v316 = vmul.f32 %v314, %v309
    %v317 = vmul.f32 %v314, %v311
    %v318 = vmul.f32 %v314, %v313
    %v319 = vadd.f32 %v277, %v315
    %v320 = vadd.f32 %v278, %v316
    %v321 = vadd.f32 %v279, %v317
    %v322 = vadd.f32 %v280, %v318
    %v323 = vstv %s292
    %v324 = vmul.f32 %v323, %v307
    %v325 = vmul.f32 %v323, %v309
    %v326 = vmul.f32 %v323, %v311
    %v327 = vmul.f32 %v323, %v313
    %v328 = vadd.f32 %v286, %v324
    %v329 = vadd.f32 %v287, %v325
    %v330 = vadd.f32 %v288, %v326
    %v331 = vadd.f32 %v289, %v327
    %s332 = sld [smem:[#allocation5 + $0x6]]
    %s333 = sld [smem:[#allocation7 + $0x6]]
    %s334 = sld [smem:[#allocation8 + $0x6]]
    %v335 = vstv %s332
    %v336 = vsub.f32 %v75, %v335
    %v337 = vsub.f32 %v76, %v335
    %v338 = vsub.f32 %v77, %v335
    %v339 = vsub.f32 %v78, %v335
    %v340 = vmul.f32 %v336, %v336
    %v341 = vmul.f32 %v337, %v337
    %v342 = vmul.f32 %v338, %v338
    %v343 = vmul.f32 %v339, %v339
    %v344 = vmul.f32 %v340, %v91
    %v345 = vmul.f32 %v341, %v91
    %v346 = vmul.f32 %v342, %v91
    %v347 = vmul.f32 %v343, %v91
    %v348 = vmul.f32 %v344, 1.442695
    %v349 = vpow.pop %v348
    %v350 = vmul.f32 %v345, 1.442695
    %v351 = vpow.pop %v350
    %v352 = vmul.f32 %v346, 1.442695
    %v353 = vpow.pop %v352
    %v354 = vmul.f32 %v347, 1.442695
    %v355 = vpow.pop %v354
    %v356 = vstv %s333
    %v357 = vmul.f32 %v356, %v349
    %v358 = vmul.f32 %v356, %v351
    %v359 = vmul.f32 %v356, %v353
    %v360 = vmul.f32 %v356, %v355
    %v361 = vadd.f32 %v319, %v357
    %v362 = vadd.f32 %v320, %v358
    %v363 = vadd.f32 %v321, %v359
    %v364 = vadd.f32 %v322, %v360
    %v365 = vstv %s334
    %v366 = vmul.f32 %v365, %v349
    %v367 = vmul.f32 %v365, %v351
    %v368 = vmul.f32 %v365, %v353
    %v369 = vmul.f32 %v365, %v355
    %v370 = vadd.f32 %v328, %v366
    %v371 = vadd.f32 %v329, %v367
    %v372 = vadd.f32 %v330, %v368
    %v373 = vadd.f32 %v331, %v369
    %v374 = vmul.f32 %v75, %v361
    %v375 = vmul.f32 %v76, %v362
    %v376 = vmul.f32 %v77, %v363
    %v377 = vmul.f32 %v78, %v364
    %v378 = vsub.f32 %v374, %v370
    %v379 = vsub.f32 %v375, %v371
    %v380 = vsub.f32 %v376, %v372
    %v381 = vsub.f32 %v377, %v373
    %v382 = vstv %s74
    %v383 = vmul.f32 %v378, %v382
    %v384 = vmul.f32 %v379, %v382
    %v385 = vmul.f32 %v380, %v382
    %v386 = vmul.f32 %v381, %v382
    %387 = vst [vmem:[#allocation10] sm:$0xff] %v361
    %388 = vst [vmem:[#allocation10 + $0x8] sm:$0xff] %v362
    %389 = vst [vmem:[#allocation10 + $0x10] sm:$0xff] %v363
    %390 = vst [vmem:[#allocation10 + $0x18] sm:$0xff] %v364
    %391 = vst [vmem:[#allocation11] sm:$0xff] %v383
    %392 = vst [vmem:[#allocation11 + $0x8] sm:$0xff] %v384
    %393 = vst [vmem:[#allocation11 + $0x10] sm:$0xff] %v385
    %394 = vst [vmem:[#allocation11 + $0x18] sm:$0xff] %v386
    %v395 = vmul.f32 %v383, %v383
    %v396 = vmul.f32 %v384, %v384
    %v397 = vmul.f32 %v385, %v385
    %v398 = vmul.f32 %v386, %v386
    %399 = vst [vmem:[#allocation13] sm:$0xff] %v395
    %400 = vst [vmem:[#allocation13 + $0x8] sm:$0xff] %v396
    %401 = vst [vmem:[#allocation13 + $0x10] sm:$0xff] %v397
    %402 = vst [vmem:[#allocation13 + $0x18] sm:$0xff] %v398
    // Predicated region
    $region38: #{run.1} parent=1 // pred_check
      _
    $region39: #{run.1} parent=1 // pred_check_branch
      %404 = sbr.rel (0) target = $region41
    $region40: #{run.1} parent=1 // pred_region
      %s406 = ssub.s32 512, 512
      %407 = vsyncadd [#allocation3], %s406
      %s408 = sshll.u32 [#allocation10], 4
      %s409 = int_to_ptr.vmem [resolvable:$true] %s408
      %414 = dma.vmem_to_hbm [thread:$0]  %s409, 512, %s5, [#allocation3], 128, 128, 8
    $region41: #{run.1} parent=1 // pred_fallthru
      _
    // Predicated region
    $region42: #{run.1} parent=1 // pred_check
      _
    $region43: #{run.1} parent=1 // pred_check_branch
      %416 = sbr.rel (0) target = $region45
    $region44: #{run.1} parent=1 // pred_region
      %s418 = ssub.s32 512, 512
      %419 = vsyncadd [#allocation12], %s418
      %s420 = sshll.u32 [#allocation11], 4
      %s421 = int_to_ptr.vmem [resolvable:$true] %s420
      %426 = dma.vmem_to_hbm [thread:$0]  %s421, 512, %s6, [#allocation12], 128, 128, 8
    $region45: #{run.1} parent=1 // pred_fallthru
      _
    // Predicated region
    $region46: #{run.1} parent=1 // pred_check
      _
    $region47: #{run.1} parent=1 // pred_check_branch
      %428 = sbr.rel (0) target = $region49
    $region48: #{run.1} parent=1 // pred_region
      %s430 = ssub.s32 512, 512
      %431 = vsyncadd [#allocation12], %s430
      %s432 = sshll.u32 [#allocation13], 4
      %s433 = int_to_ptr.vmem [resolvable:$true] %s432
      %438 = dma.vmem_to_hbm [thread:$0]  %s433, 512, %s7, [#allocation12], 128, 128, 8
    $region49: #{run.1} parent=1 // pred_fallthru
      _
    // Predicated region
    $region50: #{run.1} parent=1 // pred_check
      _
    $region51: #{run.1} parent=1 // pred_check_branch
      %440 = sbr.rel (0) target = $region53
    $region52: #{run.1} parent=1 // pred_region
      %441 = dma.done [#allocation3], 512
    $region53: #{run.1} parent=1 // pred_fallthru
      _
    // Predicated region
    $region54: #{run.1} parent=1 // pred_check
      _
    $region55: #{run.1} parent=1 // pred_check_branch
      %443 = sbr.rel (0) target = $region57
    $region56: #{run.1} parent=1 // pred_region
      %444 = dma.done [#allocation12], 512
    $region57: #{run.1} parent=1 // pred_fallthru
      _
    // Predicated region
    $region58: #{run.1} parent=1 // pred_check
      _
    $region59: #{run.1} parent=1 // pred_check_branch
      %446 = sbr.rel (0) target = $region61
    $region60: #{run.1} parent=1 // pred_region
      %447 = dma.done [#allocation12], 512
    $region61: #{run.1} parent=1 // pred_fallthru
      _
    %448 = vsyncpa [#allocation3], 1
    %449 = vsyncpa [#allocation12], 1
    %450 = vsyncpa [#allocation4], 1
    %451 = vsyncpa [#allocation6], 1
    %452 = vsyncpa [#allocation9], 1

</llo_original>
